<compile_context>
chip_gen: v7x
topology: tpu7x:2x2x1
jax: 0.10.0
libtpu: 0.0.40
codegen_flags: <defaults>
</compile_context>

<pallas_src>
import functools

import jax
import jax.numpy as jnp
import numpy as np
from jax import lax
from jax.experimental import pallas as pl
from jax.experimental.pallas import tpu as pltpu


@functools.lru_cache(maxsize=None)
def _vmem_limit_bytes():
    """Generation-aware scoped-VMEM limit: 75% of physical (48 MiB fallback)."""
    try:
        info = pltpu.get_tpu_info()
        cap = getattr(info, "vmem_capacity_bytes", None)
        if cap:
            return int(cap) * 3 // 4          # v5e/v6e -> ~96 MiB, v7x -> ~48 MiB
    except Exception:
        pass
    return 48 * 1024 * 1024


# --------------------------------------------------------------------------
# Kernel 1: fused 1x1 conv (matmul) + folded BN (+ f32 residual) (+ ReLU)
# Weight-resident: grid is 1-D over M; the (K,N) weight tile has a constant
# block index so it is fetched once and stays in VMEM.
# --------------------------------------------------------------------------
def _matmul_bn_kernel(apply_relu, has_residual, *refs):
    if has_residual:
        x_ref, w_ref, scale_ref, bias_ref, res_ref, o_ref = refs
    else:
        x_ref, w_ref, scale_ref, bias_ref, o_ref = refs
    acc = jnp.dot(x_ref[...], w_ref[...], preferred_element_type=jnp.float32)
    y = acc * scale_ref[...] + bias_ref[...]          # folded BatchNorm (f32)
    if has_residual:
        y = y + res_ref[...].astype(jnp.float32)      # residual add in f32
    if apply_relu:
        y = jnp.maximum(y, 0.0)
    o_ref[...] = y.astype(o_ref.dtype)


def fused_matmul_bn(x2d, w, scale, bias, residual=None, relu=True,
                    tm=512, out_dtype=jnp.bfloat16):
    """x2d: (M, K), w: (K, N), scale/bias: (N,), residual: (M, N) f32 or None.
    bf16 MXU operands, f32 accumulate/epilogue."""
    M, K = x2d.shape
    K2, N = w.shape
    assert K == K2
    has_res = residual is not None

    x2d = x2d.astype(jnp.bfloat16)
    w = w.astype(jnp.bfloat16)
    scale2d = scale.reshape(1, N).astype(jnp.float32)
    bias2d = bias.reshape(1, N).astype(jnp.float32)

    # M tile: multiple of 16 (bf16 sublane packing) or the full extent;
    # prefer a tile that divides M to avoid a ragged last block.
    if tm >= M:
        tm = M
    else:
        tm = max(16, (tm // 16) * 16)
        t = tm
        while t > 16 and M % t != 0:
            t -= 16
        if M % t == 0:
            tm = t
    grid = (pl.cdiv(M, tm),)

    in_specs = [
        pl.BlockSpec((tm, K), lambda i: (i, 0)),       # streamed activations
        pl.BlockSpec((K, N), lambda i: (0, 0)),        # weight: resident
        pl.BlockSpec((1, N), lambda i: (0, 0)),        # BN scale: resident
        pl.BlockSpec((1, N), lambda i: (0, 0)),        # BN bias:  resident
    ]
    args = [x2d, w, scale2d, bias2d]
    if has_res:
        in_specs.append(pl.BlockSpec((tm, N), lambda i: (i, 0)))
        args.append(residual.astype(jnp.float32))

    return pl.pallas_call(
        functools.partial(_matmul_bn_kernel, relu, has_res),
        out_shape=jax.ShapeDtypeStruct((M, N), out_dtype),
        grid=grid,
        in_specs=in_specs,
        out_specs=pl.BlockSpec((tm, N), lambda i: (i, 0)),
        compiler_params=pltpu.CompilerParams(
            dimension_semantics=("parallel",),
            vmem_limit_bytes=_vmem_limit_bytes()),
    )(*args)


# --------------------------------------------------------------------------
# Kernel 2: fused 3x3 conv + folded BN + ReLU (no im2col, no HBM pad).
# Grid = (batch, row-blocks). The unpadded image stays resident in VMEM across
# the row-block axis; at hb==0 it is copied once into a zero-filled padded
# scratch (halo built in VMEM). Each step computes th output rows with 9
# shifted (th*W, Cin) x (Cin, Cout) matmuls and writes one dense block.
# --------------------------------------------------------------------------
def _conv3x3_bn_relu_kernel(H, W, d, th, x_ref, w_ref, scale_ref, bias_ref,
                            o_ref, xp_ref):
    # x_ref : (1, H, W, Cin) bf16 (resident)   w_ref : (3, 3, Cin, Cout) bf16
    # o_ref : (1, th, W, Cout) bf16            scale/bias : (1, Cout) f32
    # xp_ref: (H+2d, W+2d, Cin) bf16 scratch (padded image)
    hb = pl.program_id(1)
    cin = x_ref.shape[-1]
    cout = o_ref.shape[-1]

    @pl.when(hb == 0)
    def _():                                   # build halo once per image
        xp_ref[...] = jnp.zeros(xp_ref.shape, xp_ref.dtype)
        xp_ref[d:d + H, d:d + W, :] = x_ref[0]

    scale = scale_ref[...]
    bias = bias_ref[...]
    h0 = hb * th

    acc = jnp.zeros((th * W, cout), jnp.float32)
    for kh in range(3):
        for kw in range(3):
            win = xp_ref[pl.ds(h0 + kh * d, th), kw * d:kw * d + W, :]
            acc = acc + jnp.dot(win.reshape(th * W, cin), w_ref[kh, kw],
                                preferred_element_type=jnp.float32)
    y = jnp.maximum(acc * scale + bias, 0.0)
    o_ref[...] = y.reshape(1, th, W, cout).astype(o_ref.dtype)


def _pick_row_block(H, W, cout):
    """Rows per step: th*W >= 256 (fill MXU M), f32 acc <= ~512 KiB, th | H."""
    acc_budget = 512 * 1024
    max_rows = max(acc_budget // max(W * cout * 4, 1), 1)
    target = max(-(-256 // max(W, 1)), 1)
    divs = [t for t in range(1, H + 1) if H % t == 0]
    good = [t for t in divs if target <= t <= max_rows]
    if good:
        return min(good)
    good = [t for t in divs if t <= max_rows]
    return max(good) if good else H


def fused_conv3x3_bn_relu(x_nhwc, w_hwio, scale, bias, dilation=1):
    N, H, W, Cin = x_nhwc.shape
    kh_, kw_, Cin2, Cout = w_hwio.shape
    assert (kh_, kw_) == (3, 3) and Cin == Cin2
    d = dilation
    Hp, Wp = H + 2 * d, W + 2 * d
    th = _pick_row_block(H, W, Cout)
    num_hb = H // th

    x = x_nhwc.astype(jnp.bfloat16)
    w = w_hwio.astype(jnp.bfloat16)
    scale2d = scale.reshape(1, Cout).astype(jnp.float32)
    bias2d = bias.reshape(1, Cout).astype(jnp.float32)

    return pl.pallas_call(
        functools.partial(_conv3x3_bn_relu_kernel, H, W, d, th),
        out_shape=jax.ShapeDtypeStruct((N, H, W, Cout), jnp.bfloat16),
        grid=(N, num_hb),
        in_specs=[
            pl.BlockSpec((1, H, W, Cin), lambda b, h: (b, 0, 0, 0)),   # resident per image
            pl.BlockSpec((3, 3, Cin, Cout), lambda b, h: (0, 0, 0, 0)),
            pl.BlockSpec((1, Cout), lambda b, h: (0, 0)),
            pl.BlockSpec((1, Cout), lambda b, h: (0, 0)),
        ],
        out_specs=pl.BlockSpec((1, th, W, Cout), lambda b, h: (b, h, 0, 0)),
        scratch_shapes=[pltpu.VMEM((Hp, Wp, Cin), jnp.bfloat16)],
        compiler_params=pltpu.CompilerParams(
            dimension_semantics=("parallel", "arbitrary"),
            vmem_limit_bytes=_vmem_limit_bytes()),
    )(x, w, scale2d, bias2d)


# --------------------------------------------------------------------------
# Parameters (deterministic, PyTorch-default BN stats, eval mode)
# --------------------------------------------------------------------------
def fold_bn(gamma, beta, mean, var, eps=1e-5):
    scale = gamma / jnp.sqrt(var + eps)
    bias = beta - mean * scale
    return scale, bias


def init_params(key, inplanes, planes):
    k1, k2, k3 = jax.random.split(key, 3)
    w1 = jax.random.normal(k1, (planes, inplanes, 1, 1), jnp.float32) * 0.1
    w2 = jax.random.normal(k2, (planes, planes, 3, 3), jnp.float32) * 0.1
    w3 = jax.random.normal(k3, (planes * 4, planes, 1, 1), jnp.float32) * 0.1

    def bn_params(c):
        return (jnp.ones((c,), jnp.float32),   # gamma
                jnp.zeros((c,), jnp.float32),  # beta
                jnp.zeros((c,), jnp.float32),  # running_mean
                jnp.ones((c,), jnp.float32))   # running_var

    return {
        "w1_oihw": w1, "w2_oihw": w2, "w3_oihw": w3,
        "bn1": bn_params(planes),
        "bn2": bn_params(planes),
        "bn3": bn_params(planes * 4),
    }


# --------------------------------------------------------------------------
# Bottleneck forward (NHWC core; NCHW wrapper matching the PyTorch module)
# --------------------------------------------------------------------------
def bottleneck_forward_nhwc(x_nhwc, params, stride=1, dilation=1, multi_grid=1):
    assert stride == 1, "identity residual (downsample=None) requires stride=1"
    N, H, W, Cin = x_nhwc.shape
    planes = params["w1_oihw"].shape[0]
    assert Cin == planes * 4, "downsample=None requires inplanes == 4*planes"

    M = N * H * W
    x2d_f32 = x_nhwc.reshape(M, Cin).astype(jnp.float32)

    # matmul-layout weights
    w1 = params["w1_oihw"][:, :, 0, 0].T                  # (Cin, planes)
    w2 = jnp.transpose(params["w2_oihw"], (2, 3, 1, 0))    # (3, 3, Cin_p, Cout_p)
    w3 = params["w3_oihw"][:, :, 0, 0].T                   # (planes, 4*planes)

    s1, b1 = fold_bn(*params["bn1"])
    s2, b2 = fold_bn(*params["bn2"])
    s3, b3 = fold_bn(*params["bn3"])

    # conv1 (1x1) + bn1 + relu  (weight-resident matmul)
    h1 = fused_matmul_bn(x2d_f32, w1, s1, b1, relu=True)
    h1 = h1.reshape(N, H, W, planes)

    # conv2 (3x3, pad=dil*mg, dilation=dil*mg) + bn2 + relu (halo built in VMEM)
    d = dilation * multi_grid
    h2 = fused_conv3x3_bn_relu(h1, w2, s2, b2, dilation=d)
    h2 = h2.reshape(M, planes)

    # conv3 (1x1) + bn3 + identity residual (f32) + relu (all fused)
    out2d = fused_matmul_bn(h2, w3, s3, b3, residual=x2d_f32, relu=True,
                            out_dtype=jnp.float32)
    return out2d.reshape(N, H, W, planes * 4)


def bottleneck_forward(x_nchw, params, stride=1, dilation=1, multi_grid=1):
    # For stacked blocks, call bottleneck_forward_nhwc directly and transpose
    # only at the model boundary (transposes are full HBM passes).
    x_nhwc = jnp.transpose(x_nchw, (0, 2, 3, 1))
    out = bottleneck_forward_nhwc(x_nhwc, params, stride, dilation, multi_grid)
    return jnp.transpose(out, (0, 3, 1, 2))                # back to NCHW


# --------------------------------------------------------------------------
# Pure-JAX reference (NCHW convs) for correctness check
# --------------------------------------------------------------------------
def reference_forward(x, params, dilation=1, multi_grid=1):
    d = dilation * multi_grid

    def conv(x, w, stride=1, dil=1, padding=0):
        return lax.conv_general_dilated(
            x, w, (stride, stride), [(padding, padding)] * 2,
            rhs_dilation=(dil, dil),
            dimension_numbers=("NCHW", "OIHW", "NCHW"))

    def bn(x, g, b, m, v, eps=1e-5):
        g, b, m, v = (t.reshape(1, -1, 1, 1) for t in (g, b, m, v))
        return g * (x - m) / jnp.sqrt(v + eps) + b

    residual = x
    out = jax.nn.relu(bn(conv(x, params["w1_oihw"]), *params["bn1"]))
    out = jax.nn.relu(bn(conv(out, params["w2_oihw"], padding=d, dil=d),
                         *params["bn2"]))
    out = bn(conv(out, params["w3_oihw"]), *params["bn3"])
    return jax.nn.relu(out + residual)


if __name__ == "__main__":
    planes = 4
    inplanes = planes * 4            # identity residual (downsample=None)
    N, H, W = 2, 16, 16

    key = jax.random.PRNGKey(0)
    kx, kp = jax.random.split(key)
    x = jax.random.normal(kx, (N, inplanes, H, W), jnp.float32)
    params = init_params(kp, inplanes, planes)

    # Reference uses the same bf16-rounded operands (kernel computes on the
    # bf16 MXU with f32 accumulation), so tolerances stay tight.
    def r16(t):
        return t.astype(jnp.bfloat16).astype(jnp.float32)

    x_r = r16(x)
    out = jax.block_until_ready(bottleneck_forward(x_r, params))

    params_ref = dict(params)
    for k in ("w1_oihw", "w2_oihw", "w3_oihw"):
        params_ref[k] = r16(params[k])
    ref = jax.block_until_ready(reference_forward(x_r, params_ref))

    assert out.shape == (N, planes * 4, H, W)
    np.testing.assert_allclose(np.asarray(out), np.asarray(ref),
                               rtol=3e-2, atol=3e-2)
    print("KERNEL_OK")
</pallas_src>

<mosaic_0001>
module attributes {stable_mosaic.version = 11 : i64} {
  func.func @_matmul_bn_kernel(%arg0: i32, %arg1: memref<512x16xbf16, #tpu.memory_space<vmem>>, %arg2: memref<16x4xbf16, #tpu.memory_space<vmem>>, %arg3: memref<1x4xf32, #tpu.memory_space<vmem>>, %arg4: memref<1x4xf32, #tpu.memory_space<vmem>>, %arg5: memref<512x4xbf16, #tpu.memory_space<vmem>>) attributes {dimension_semantics = [#tpu.dimension_semantics<parallel>], iteration_bounds = array<i64: 1>, scalar_prefetch = 0 : i64, scratch_operands = 0 : i64, tpu.core_type = #tpu.core_type<tc>, window_params = [{transform_indices = @transform_0, window_bounds = array<i64: 512, 16>}, {pipeline_mode = #tpu.pipeline_mode<synchronous>, transform_indices = @transform_1, window_bounds = array<i64: 16, 4>}, {pipeline_mode = #tpu.pipeline_mode<synchronous>, transform_indices = @transform_2, window_bounds = array<i64: 1, 4>}, {pipeline_mode = #tpu.pipeline_mode<synchronous>, transform_indices = @transform_3, window_bounds = array<i64: 1, 4>}, {transform_indices = @transform_4, window_bounds = array<i64: 512, 4>}]} {
    %c0 = arith.constant 0 : index
    %c0_0 = arith.constant 0 : index
    %0 = vector.load %arg1[%c0, %c0_0] : memref<512x16xbf16, #tpu.memory_space<vmem>>, vector<512x16xbf16>
    %c0_1 = arith.constant 0 : index
    %c0_2 = arith.constant 0 : index
    %1 = vector.load %arg2[%c0_1, %c0_2] : memref<16x4xbf16, #tpu.memory_space<vmem>>, vector<16x4xbf16>
    %cst = arith.constant dense<0.000000e+00> : vector<512x4xf32>
    %2 = tpu.matmul %0, %1, %cst {dimension_numbers = #tpu.dot_dimension_numbers<[1], [0], [0], [1], [0, 0, 1, 1], [], []>} : vector<512x16xbf16>, vector<16x4xbf16>, vector<512x4xf32> -> vector<512x4xf32>
    %c0_3 = arith.constant 0 : index
    %c0_4 = arith.constant 0 : index
    %3 = vector.load %arg3[%c0_3, %c0_4] : memref<1x4xf32, #tpu.memory_space<vmem>>, vector<1x4xf32>
    %4 = vector.broadcast %3 : vector<1x4xf32> to vector<512x4xf32>
    %5 = arith.mulf %2, %4 : vector<512x4xf32>
    %c0_5 = arith.constant 0 : index
    %c0_6 = arith.constant 0 : index
    %6 = vector.load %arg4[%c0_5, %c0_6] : memref<1x4xf32, #tpu.memory_space<vmem>>, vector<1x4xf32>
    %7 = vector.broadcast %6 : vector<1x4xf32> to vector<512x4xf32>
    %8 = arith.addf %5, %7 : vector<512x4xf32>
    %cst_7 = arith.constant 0.000000e+00 : f32
    %9 = vector.broadcast %cst_7 : f32 to vector<512x4xf32>
    %10 = arith.maximumf %8, %9 : vector<512x4xf32>
    %11 = arith.truncf %10 : vector<512x4xf32> to vector<512x4xbf16>
    %c0_8 = arith.constant 0 : index
    %c0_9 = arith.constant 0 : index
    %12 = vector.load %arg5[%c0_8, %c0_9] : memref<512x4xbf16, #tpu.memory_space<vmem>>, vector<512x4xbf16>
    tpu.vector_store %arg5[%c0_8, %c0_9], %11 {strides = array<i32>} : memref<512x4xbf16, #tpu.memory_space<vmem>>, vector<512x4xbf16>,
    return
  }
  func.func @transform_0(%arg0: i32) -> (i32, i32) {
    %c0_i32 = arith.constant 0 : i32
    %c0_i32_0 = arith.constant 0 : i32
    return %arg0, %c0_i32 : i32, i32
  }
  func.func @transform_1(%arg0: i32) -> (i32, i32) {
    %c0_i32 = arith.constant 0 : i32
    %c0_i32_0 = arith.constant 0 : i32
    %c0_i32_1 = arith.constant 0 : i32
    return %c0_i32, %c0_i32_0 : i32, i32
  }
  func.func @transform_2(%arg0: i32) -> (i32, i32) {
    %c0_i32 = arith.constant 0 : i32
    %c0_i32_0 = arith.constant 0 : i32
    %c0_i32_1 = arith.constant 0 : i32
    return %c0_i32, %c0_i32_0 : i32, i32
  }
  func.func @transform_3(%arg0: i32) -> (i32, i32) {
    %c0_i32 = arith.constant 0 : i32
    %c0_i32_0 = arith.constant 0 : i32
    %c0_i32_1 = arith.constant 0 : i32
    return %c0_i32, %c0_i32_0 : i32, i32
  }
  func.func @transform_4(%arg0: i32) -> (i32, i32) {
    %c0_i32 = arith.constant 0 : i32
    %c0_i32_0 = arith.constant 0 : i32
    return %arg0, %c0_i32 : i32, i32
  }
}

</mosaic_0001>

<llo_original>
// kernel: tpu_custom_call.1
$region0: #{tpu_custom_call.1}
  #allocation0 [shape = 'u32[]', space=smem, size = 0x4, offset = 0x4, fixed_abs, tag = 'smem constant byte address 0x4 - core index']
  #allocation1 [shape = 'u32[144,128]{1,0:T(1,128)}', space=vmem, size = 0x12000, scoped, tag = 'internal scratch']
  %s0 = inlined_call_operand.vmem [shape: bf16[512,16], index: 0, kind: input, shape index: {}]
  %s1 = inlined_call_operand.vmem [shape: bf16[16,4], index: 1, kind: input, shape index: {}]
  %s2 = inlined_call_operand.vmem [shape: f32[1,4], index: 2, kind: input, shape index: {}]
  %s3 = inlined_call_operand.vmem [shape: f32[1,4], index: 3, kind: input, shape index: {}]
  %s4 = inlined_call_operand.vmem [shape: bf16[512,4], index: 4, kind: output, shape index: {}]
  %s5 = sld [smem:[#allocation0]]
  $region26: #{tpu_custom_call.1} parent=0
    _
  %s7 = ssub.s32 1, %s5
  %s8 = scalar_select 0, %s7, %s5
  // Predicated region
  $region2: #{tpu_custom_call.1} parent=0 // pred_check
    _
  $region3: #{tpu_custom_call.1} parent=0 // pred_check_branch
    %10 = sbr.rel (0) target = $region5
  $region4: #{tpu_custom_call.1} parent=0 // pred_region
    _
  $region5: #{tpu_custom_call.1} parent=0 // pred_fallthru
    _
  // Predicated region
  $region6: #{tpu_custom_call.1} parent=0 // pred_check
    _
  $region7: #{tpu_custom_call.1} parent=0 // pred_check_branch
    %12 = sbr.rel (0) target = $region9
  $region8: #{tpu_custom_call.1} parent=0 // pred_region
    _
  $region9: #{tpu_custom_call.1} parent=0 // pred_fallthru
    _
  // Predicated region
  $region10: #{tpu_custom_call.1} parent=0 // pred_check
    _
  $region11: #{tpu_custom_call.1} parent=0 // pred_check_branch
    %14 = sbr.rel (0) target = $region13
  $region12: #{tpu_custom_call.1} parent=0 // pred_region
    _
  $region13: #{tpu_custom_call.1} parent=0 // pred_fallthru
    _
  // Predicated region
  $region14: #{tpu_custom_call.1} parent=0 // pred_check
    _
  $region15: #{tpu_custom_call.1} parent=0 // pred_check_branch
    %16 = sbr.rel (0) target = $region17
  $region16: #{tpu_custom_call.1} parent=0 // pred_region
    _
  $region17: #{tpu_custom_call.1} parent=0 // pred_fallthru
    _
  %v18 = vld [vmem:[%s0] sm:$0xf]
  %v19 = vld [vmem:[%s0 + $0x4] sm:$0xf]
  %v20 = vld [vmem:[%s0 + $0x8] sm:$0xf]
  %v21 = vld [vmem:[%s0 + $0xc] sm:$0xf]
  %v22 = vld [vmem:[%s0 + $0x10] sm:$0xf]
  %v23 = vld [vmem:[%s0 + $0x14] sm:$0xf]
  %v24 = vld [vmem:[%s0 + $0x18] sm:$0xf]
  %v25 = vld [vmem:[%s0 + $0x1c] sm:$0xf]
  %v26 = vld [vmem:[%s0 + $0x20] sm:$0xf]
  %v27 = vld [vmem:[%s0 + $0x24] sm:$0xf]
  %v28 = vld [vmem:[%s0 + $0x28] sm:$0xf]
  %v29 = vld [vmem:[%s0 + $0x2c] sm:$0xf]
  %v30 = vld [vmem:[%s0 + $0x30] sm:$0xf]
  %v31 = vld [vmem:[%s0 + $0x34] sm:$0xf]
  %v32 = vld [vmem:[%s0 + $0x38] sm:$0xf]
  %v33 = vld [vmem:[%s0 + $0x3c] sm:$0xf]
  %v34 = vld [vmem:[%s0 + $0x40] sm:$0xf]
  %v35 = vld [vmem:[%s0 + $0x44] sm:$0xf]
  %v36 = vld [vmem:[%s0 + $0x48] sm:$0xf]
  %v37 = vld [vmem:[%s0 + $0x4c] sm:$0xf]
  %v38 = vld [vmem:[%s0 + $0x50] sm:$0xf]
  %v39 = vld [vmem:[%s0 + $0x54] sm:$0xf]
  %v40 = vld [vmem:[%s0 + $0x58] sm:$0xf]
  %v41 = vld [vmem:[%s0 + $0x5c] sm:$0xf]
  %v42 = vld [vmem:[%s0 + $0x60] sm:$0xf]
  %v43 = vld [vmem:[%s0 + $0x64] sm:$0xf]
  %v44 = vld [vmem:[%s0 + $0x68] sm:$0xf]
  %v45 = vld [vmem:[%s0 + $0x6c] sm:$0xf]
  %v46 = vld [vmem:[%s0 + $0x70] sm:$0xf]
  %v47 = vld [vmem:[%s0 + $0x74] sm:$0xf]
  %v48 = vld [vmem:[%s0 + $0x78] sm:$0xf]
  %v49 = vld [vmem:[%s0 + $0x7c] sm:$0xf]
  %v50 = vld [vmem:[%s0 + $0x80] sm:$0xf]
  %v51 = vld [vmem:[%s0 + $0x84] sm:$0xf]
  %v52 = vld [vmem:[%s0 + $0x88] sm:$0xf]
  %v53 = vld [vmem:[%s0 + $0x8c] sm:$0xf]
  %v54 = vld [vmem:[%s0 + $0x90] sm:$0xf]
  %v55 = vld [vmem:[%s0 + $0x94] sm:$0xf]
  %v56 = vld [vmem:[%s0 + $0x98] sm:$0xf]
  %v57 = vld [vmem:[%s0 + $0x9c] sm:$0xf]
  %v58 = vld [vmem:[%s0 + $0xa0] sm:$0xf]
  %v59 = vld [vmem:[%s0 + $0xa4] sm:$0xf]
  %v60 = vld [vmem:[%s0 + $0xa8] sm:$0xf]
  %v61 = vld [vmem:[%s0 + $0xac] sm:$0xf]
  %v62 = vld [vmem:[%s0 + $0xb0] sm:$0xf]
  %v63 = vld [vmem:[%s0 + $0xb4] sm:$0xf]
  %v64 = vld [vmem:[%s0 + $0xb8] sm:$0xf]
  %v65 = vld [vmem:[%s0 + $0xbc] sm:$0xf]
  %v66 = vld [vmem:[%s0 + $0xc0] sm:$0xf]
  %v67 = vld [vmem:[%s0 + $0xc4] sm:$0xf]
  %v68 = vld [vmem:[%s0 + $0xc8] sm:$0xf]
  %v69 = vld [vmem:[%s0 + $0xcc] sm:$0xf]
  %v70 = vld [vmem:[%s0 + $0xd0] sm:$0xf]
  %v71 = vld [vmem:[%s0 + $0xd4] sm:$0xf]
  %v72 = vld [vmem:[%s0 + $0xd8] sm:$0xf]
  %v73 = vld [vmem:[%s0 + $0xdc] sm:$0xf]
  %v74 = vld [vmem:[%s0 + $0xe0] sm:$0xf]
  %v75 = vld [vmem:[%s0 + $0xe4] sm:$0xf]
  %v76 = vld [vmem:[%s0 + $0xe8] sm:$0xf]
  %v77 = vld [vmem:[%s0 + $0xec] sm:$0xf]
  %v78 = vld [vmem:[%s0 + $0xf0] sm:$0xf]
  %v79 = vld [vmem:[%s0 + $0xf4] sm:$0xf]
  %v80 = vld [vmem:[%s0 + $0xf8] sm:$0xf]
  %v81 = vld [vmem:[%s0 + $0xfc] sm:$0xf]
  %v82 = vld [vmem:[%s1] sm:$0xf]
  %v83 = vld [vmem:[%s1 + $0x4] sm:$0xf]
  %v148 = vunpack.c.l.b16 %v18
  %v149 = vunpack.c.l.b16 %v19
  %v150 = vunpack.c.l.b16 %v20
  %v151 = vunpack.c.l.b16 %v21
  %v152 = vunpack.c.l.b16 %v22
  %v153 = vunpack.c.l.b16 %v23
  %v154 = vunpack.c.l.b16 %v24
  %v155 = vunpack.c.l.b16 %v25
  %v156 = vunpack.c.l.b16 %v26
  %v157 = vunpack.c.l.b16 %v27
  %v158 = vunpack.c.l.b16 %v28
  %v159 = vunpack.c.l.b16 %v29
  %v160 = vunpack.c.l.b16 %v30
  %v161 = vunpack.c.l.b16 %v31
  %v162 = vunpack.c.l.b16 %v32
  %v163 = vunpack.c.l.b16 %v33
  %v164 = vunpack.c.l.b16 %v34
  %v165 = vunpack.c.l.b16 %v35
  %v166 = vunpack.c.l.b16 %v36
  %v167 = vunpack.c.l.b16 %v37
  %v168 = vunpack.c.l.b16 %v38
  %v169 = vunpack.c.l.b16 %v39
  %v170 = vunpack.c.l.b16 %v40
  %v171 = vunpack.c.l.b16 %v41
  %v172 = vunpack.c.l.b16 %v42
  %v173 = vunpack.c.l.b16 %v43
  %v174 = vunpack.c.l.b16 %v44
  %v175 = vunpack.c.l.b16 %v45
  %v176 = vunpack.c.l.b16 %v46
  %v177 = vunpack.c.l.b16 %v47
  %v178 = vunpack.c.l.b16 %v48
  %v179 = vunpack.c.l.b16 %v49
  %v180 = vunpack.c.l.b16 %v50
  %v181 = vunpack.c.l.b16 %v51
  %v182 = vunpack.c.l.b16 %v52
  %v183 = vunpack.c.l.b16 %v53
  %v184 = vunpack.c.l.b16 %v54
  %v185 = vunpack.c.l.b16 %v55
  %v186 = vunpack.c.l.b16 %v56
  %v187 = vunpack.c.l.b16 %v57
  %v188 = vunpack.c.l.b16 %v58
  %v189 = vunpack.c.l.b16 %v59
  %v190 = vunpack.c.l.b16 %v60
  %v191 = vunpack.c.l.b16 %v61
  %v192 = vunpack.c.l.b16 %v62
  %v193 = vunpack.c.l.b16 %v63
  %v194 = vunpack.c.l.b16 %v64
  %v195 = vunpack.c.l.b16 %v65
  %v196 = vunpack.c.l.b16 %v66
  %v197 = vunpack.c.l.b16 %v67
  %v198 = vunpack.c.l.b16 %v68
  %v199 = vunpack.c.l.b16 %v69
  %v200 = vunpack.c.l.b16 %v70
  %v201 = vunpack.c.l.b16 %v71
  %v202 = vunpack.c.l.b16 %v72
  %v203 = vunpack.c.l.b16 %v73
  %v204 = vunpack.c.l.b16 %v74
  %v205 = vunpack.c.l.b16 %v75
  %v206 = vunpack.c.l.b16 %v76
  %v207 = vunpack.c.l.b16 %v77
  %v208 = vunpack.c.l.b16 %v78
  %v209 = vunpack.c.l.b16 %v79
  %v210 = vunpack.c.l.b16 %v80
  %v211 = vunpack.c.l.b16 %v81
  %v212 = vpack.c.b16 %v149, %v148
  %v213 = vpack.c.b16 %v151, %v150
  %v214 = vpack.c.b16 %v153, %v152
  %v215 = vpack.c.b16 %v155, %v154
  %v216 = vpack.c.b16 %v157, %v156
  %v217 = vpack.c.b16 %v159, %v158
  %v218 = vpack.c.b16 %v161, %v160
  %v219 = vpack.c.b16 %v163, %v162
  %v220 = vpack.c.b16 %v165, %v164
  %v221 = vpack.c.b16 %v167, %v166
  %v222 = vpack.c.b16 %v169, %v168
  %v223 = vpack.c.b16 %v171, %v170
  %v224 = vpack.c.b16 %v173, %v172
  %v225 = vpack.c.b16 %v175, %v174
  %v226 = vpack.c.b16 %v177, %v176
  %v227 = vpack.c.b16 %v179, %v178
  %v228 = vpack.c.b16 %v181, %v180
  %v229 = vpack.c.b16 %v183, %v182
  %v230 = vpack.c.b16 %v185, %v184
  %v231 = vpack.c.b16 %v187, %v186
  %v232 = vpack.c.b16 %v189, %v188
  %v233 = vpack.c.b16 %v191, %v190
  %v234 = vpack.c.b16 %v193, %v192
  %v235 = vpack.c.b16 %v195, %v194
  %v236 = vpack.c.b16 %v197, %v196
  %v237 = vpack.c.b16 %v199, %v198
  %v238 = vpack.c.b16 %v201, %v200
  %v239 = vpack.c.b16 %v203, %v202
  %v240 = vpack.c.b16 %v205, %v204
  %v241 = vpack.c.b16 %v207, %v206
  %v242 = vpack.c.b16 %v209, %v208
  %v243 = vpack.c.b16 %v211, %v210
  %v246 = vunpack.c.l.b16 %v82
  %v247 = vunpack.c.l.b16 %v83
  %v248 = vpack.c.b16 %v247, %v246
  %vm250 = vcmask 130048
  %v252 = vsel %vm250, %v212, 0
  %v255 = vsel %vm250, %v213, 0
  %v258 = vsel %vm250, %v214, 0
  %v261 = vsel %vm250, %v215, 0
  %v264 = vsel %vm250, %v216, 0
  %v267 = vsel %vm250, %v217, 0
  %v270 = vsel %vm250, %v218, 0
  %v273 = vsel %vm250, %v219, 0
  %v276 = vsel %vm250, %v220, 0
  %v279 = vsel %vm250, %v221, 0
  %v282 = vsel %vm250, %v222, 0
  %v285 = vsel %vm250, %v223, 0
  %v288 = vsel %vm250, %v224, 0
  %v291 = vsel %vm250, %v225, 0
  %v294 = vsel %vm250, %v226, 0
  %v297 = vsel %vm250, %v227, 0
  %v300 = vsel %vm250, %v228, 0
  %v303 = vsel %vm250, %v229, 0
  %v306 = vsel %vm250, %v230, 0
  %v309 = vsel %vm250, %v231, 0
  %v312 = vsel %vm250, %v232, 0
  %v315 = vsel %vm250, %v233, 0
  %v318 = vsel %vm250, %v234, 0
  %v321 = vsel %vm250, %v235, 0
  %v324 = vsel %vm250, %v236, 0
  %v327 = vsel %vm250, %v237, 0
  %v330 = vsel %vm250, %v238, 0
  %v333 = vsel %vm250, %v239, 0
  %v336 = vsel %vm250, %v240, 0
  %v339 = vsel %vm250, %v241, 0
  %v342 = vsel %vm250, %v242, 0
  %v345 = vsel %vm250, %v243, 0
  %347 = vmatprep.subr.bf16.mxu0 0
  %348 = vmatpush1.bf16.msra.mxu0 %v248
  %349 = vmatprep.subr.bf16.mxu0 0
  %350 = vmatpush1.bf16.msra.mxu0 0
  %351 = vmatprep.subr.bf16.mxu0 0
  %352 = vmatpush1.bf16.msra.mxu0 0
  %353 = vmatprep.subr.bf16.mxu0 0
  %354 = vmatpush1.bf16.msra.mxu0 0
  %355 = vmatprep.subr.bf16.mxu0 0
  %356 = vmatpush1.bf16.msra.mxu0 0
  %357 = vmatprep.subr.bf16.mxu0 0
  %358 = vmatpush1.bf16.msra.mxu0 0
  %359 = vmatprep.subr.bf16.mxu0 0
  %360 = vmatpush1.bf16.msra.mxu0 0
  %361 = vmatprep.subr.bf16.mxu0 0
  %362 = vmatpush1.bf16.msra.mxu0 0
  %363 = vmatprep.subr.bf16.mxu0 0
  %364 = vmatpush1.bf16.msra.mxu0 0
  %365 = vmatprep.subr.bf16.mxu0 0
  %366 = vmatpush1.bf16.msra.mxu0 0
  %367 = vmatprep.subr.bf16.mxu0 0
  %368 = vmatpush1.bf16.msra.mxu0 0
  %369 = vmatprep.subr.bf16.mxu0 0
  %370 = vmatpush1.bf16.msra.mxu0 0
  %371 = vmatprep.subr.bf16.mxu0 0
  %372 = vmatpush1.bf16.msra.mxu0 0
  %373 = vmatprep.subr.bf16.mxu0 0
  %374 = vmatpush1.bf16.msra.mxu0 0
  %375 = vmatprep.subr.bf16.mxu0 0
  %376 = vmatpush1.bf16.msra.mxu0 0
  %377 = vmatprep.subr.bf16.mxu0 0
  %378 = vmatpush1.bf16.msra.mxu0 0
  %379 = vmatprep.mubr.bf16.mxu0 0
  %380 = vmatmul.mubr.bf16.gmra.mrb[0].mxu0 %v252
  %v381 = vpop.f32.mrb[0].mxu0
  %v382 = vadd.f32 0.0, %v381
  %v383 = vpop.f32.mrb[0].mxu0
  %v384 = vpop.f32.mrb[0].mxu0
  %v385 = vadd.f32 0.0, %v384
  %v386 = vpop.f32.mrb[0].mxu0
  %387 = vmatprep.mubr.bf16.mxu0 0
  %388 = vmatmul.mubr.bf16.gmra.mrb[0].mxu0 %v255
  %v389 = vpop.f32.mrb[0].mxu0
  %v390 = vadd.f32 0.0, %v389
  %v391 = vpop.f32.mrb[0].mxu0
  %v392 = vpop.f32.mrb[0].mxu0
  %v393 = vadd.f32 0.0, %v392
  %v394 = vpop.f32.mrb[0].mxu0
  %395 = vmatprep.mubr.bf16.mxu0 0
  %396 = vmatmul.mubr.bf16.gmra.mrb[0].mxu0 %v258
  %v397 = vpop.f32.mrb[0].mxu0
  %v398 = vadd.f32 0.0, %v397
  %v399 = vpop.f32.mrb[0].mxu0
  %v400 = vpop.f32.mrb[0].mxu0
  %v401 = vadd.f32 0.0, %v400
  %v402 = vpop.f32.mrb[0].mxu0
  %403 = vmatprep.mubr.bf16.mxu0 0
  %404 = vmatmul.mubr.bf16.gmra.mrb[0].mxu0 %v261
  %v405 = vpop.f32.mrb[0].mxu0
  %v406 = vadd.f32 0.0, %v405
  %v407 = vpop.f32.mrb[0].mxu0
  %v408 = vpop.f32.mrb[0].mxu0
  %v409 = vadd.f32 0.0, %v408
  %v410 = vpop.f32.mrb[0].mxu0
  %411 = vmatprep.mubr.bf16.mxu0 0
  %412 = vmatmul.mubr.bf16.gmra.mrb[0].mxu0 %v264
  %v413 = vpop.f32.mrb[0].mxu0
  %v414 = vadd.f32 0.0, %v413
  %v415 = vpop.f32.mrb[0].mxu0
  %v416 = vpop.f32.mrb[0].mxu0
  %v417 = vadd.f32 0.0, %v416
  %v418 = vpop.f32.mrb[0].mxu0
  %419 = vmatprep.mubr.bf16.mxu0 0
  %420 = vmatmul.mubr.bf16.gmra.mrb[0].mxu0 %v267
  %v421 = vpop.f32.mrb[0].mxu0
  %v422 = vadd.f32 0.0, %v421
  %v423 = vpop.f32.mrb[0].mxu0
  %v424 = vpop.f32.mrb[0].mxu0
  %v425 = vadd.f32 0.0, %v424
  %v426 = vpop.f32.mrb[0].mxu0
  %427 = vmatprep.mubr.bf16.mxu0 0
  %428 = vmatmul.mubr.bf16.gmra.mrb[0].mxu0 %v270
  %v429 = vpop.f32.mrb[0].mxu0
  %v430 = vadd.f32 0.0, %v429
  %v431 = vpop.f32.mrb[0].mxu0
  %v432 = vpop.f32.mrb[0].mxu0
  %v433 = vadd.f32 0.0, %v432
  %v434 = vpop.f32.mrb[0].mxu0
  %435 = vmatprep.mubr.bf16.mxu0 0
  %436 = vmatmul.mubr.bf16.gmra.mrb[0].mxu0 %v273
  %v437 = vpop.f32.mrb[0].mxu0
  %v438 = vadd.f32 0.0, %v437
  %v439 = vpop.f32.mrb[0].mxu0
  %v440 = vpop.f32.mrb[0].mxu0
  %v441 = vadd.f32 0.0, %v440
  %v442 = vpop.f32.mrb[0].mxu0
  %443 = vmatprep.mubr.bf16.mxu0 0
  %444 = vmatmul.mubr.bf16.gmra.mrb[0].mxu0 %v276
  %v445 = vpop.f32.mrb[0].mxu0
  %v446 = vadd.f32 0.0, %v445
  %v447 = vpop.f32.mrb[0].mxu0
  %v448 = vpop.f32.mrb[0].mxu0
  %v449 = vadd.f32 0.0, %v448
  %v450 = vpop.f32.mrb[0].mxu0
  %451 = vmatprep.mubr.bf16.mxu0 0
  %452 = vmatmul.mubr.bf16.gmra.mrb[0].mxu0 %v279
  %v453 = vpop.f32.mrb[0].mxu0
  %v454 = vadd.f32 0.0, %v453
  %v455 = vpop.f32.mrb[0].mxu0
  %v456 = vpop.f32.mrb[0].mxu0
  %v457 = vadd.f32 0.0, %v456
  %v458 = vpop.f32.mrb[0].mxu0
  %459 = vmatprep.mubr.bf16.mxu0 0
  %460 = vmatmul.mubr.bf16.gmra.mrb[0].mxu0 %v282
  %v461 = vpop.f32.mrb[0].mxu0
  %v462 = vadd.f32 0.0, %v461
  %v463 = vpop.f32.mrb[0].mxu0
  %v464 = vpop.f32.mrb[0].mxu0
  %v465 = vadd.f32 0.0, %v464
  %v466 = vpop.f32.mrb[0].mxu0
  %467 = vmatprep.mubr.bf16.mxu0 0
  %468 = vmatmul.mubr.bf16.gmra.mrb[0].mxu0 %v285
  %v469 = vpop.f32.mrb[0].mxu0
  %v470 = vadd.f32 0.0, %v469
  %v471 = vpop.f32.mrb[0].mxu0
  %v472 = vpop.f32.mrb[0].mxu0
  %v473 = vadd.f32 0.0, %v472
  %v474 = vpop.f32.mrb[0].mxu0
  %475 = vmatprep.mubr.bf16.mxu0 0
  %476 = vmatmul.mubr.bf16.gmra.mrb[0].mxu0 %v288
  %v477 = vpop.f32.mrb[0].mxu0
  %v478 = vadd.f32 0.0, %v477
  %v479 = vpop.f32.mrb[0].mxu0
  %v480 = vpop.f32.mrb[0].mxu0
  %v481 = vadd.f32 0.0, %v480
  %v482 = vpop.f32.mrb[0].mxu0
  %483 = vmatprep.mubr.bf16.mxu0 0
  %484 = vmatmul.mubr.bf16.gmra.mrb[0].mxu0 %v291
  %v485 = vpop.f32.mrb[0].mxu0
  %v486 = vadd.f32 0.0, %v485
  %v487 = vpop.f32.mrb[0].mxu0
  %v488 = vpop.f32.mrb[0].mxu0
  %v489 = vadd.f32 0.0, %v488
  %v490 = vpop.f32.mrb[0].mxu0
  %491 = vmatprep.mubr.bf16.mxu0 0
  %492 = vmatmul.mubr.bf16.gmra.mrb[0].mxu0 %v294
  %v493 = vpop.f32.mrb[0].mxu0
  %v494 = vadd.f32 0.0, %v493
  %v495 = vpop.f32.mrb[0].mxu0
  %v496 = vpop.f32.mrb[0].mxu0
  %v497 = vadd.f32 0.0, %v496
  %v498 = vpop.f32.mrb[0].mxu0
  %499 = vmatprep.mubr.bf16.mxu0 0
  %500 = vmatmul.mubr.bf16.gmra.mrb[0].mxu0 %v297
  %v501 = vpop.f32.mrb[0].mxu0
  %v502 = vadd.f32 0.0, %v501
  %v503 = vpop.f32.mrb[0].mxu0
  %v504 = vpop.f32.mrb[0].mxu0
  %v505 = vadd.f32 0.0, %v504
  %v506 = vpop.f32.mrb[0].mxu0
  %507 = vmatprep.mubr.bf16.mxu0 0
  %508 = vmatmul.mubr.bf16.gmra.mrb[0].mxu0 %v300
  %v509 = vpop.f32.mrb[0].mxu0
  %v510 = vadd.f32 0.0, %v509
  %v511 = vpop.f32.mrb[0].mxu0
  %v512 = vpop.f32.mrb[0].mxu0
  %v513 = vadd.f32 0.0, %v512
  %v514 = vpop.f32.mrb[0].mxu0
  %515 = vmatprep.mubr.bf16.mxu0 0
  %516 = vmatmul.mubr.bf16.gmra.mrb[0].mxu0 %v303
  %v517 = vpop.f32.mrb[0].mxu0
  %v518 = vadd.f32 0.0, %v517
  %v519 = vpop.f32.mrb[0].mxu0
  %v520 = vpop.f32.mrb[0].mxu0
  %v521 = vadd.f32 0.0, %v520
  %v522 = vpop.f32.mrb[0].mxu0
  %523 = vmatprep.mubr.bf16.mxu0 0
  %524 = vmatmul.mubr.bf16.gmra.mrb[0].mxu0 %v306
  %v525 = vpop.f32.mrb[0].mxu0
  %v526 = vadd.f32 0.0, %v525
  %v527 = vpop.f32.mrb[0].mxu0
  %v528 = vpop.f32.mrb[0].mxu0
  %v529 = vadd.f32 0.0, %v528
  %v530 = vpop.f32.mrb[0].mxu0
  %531 = vmatprep.mubr.bf16.mxu0 0
  %532 = vmatmul.mubr.bf16.gmra.mrb[0].mxu0 %v309
  %v533 = vpop.f32.mrb[0].mxu0
  %v534 = vadd.f32 0.0, %v533
  %v535 = vpop.f32.mrb[0].mxu0
  %v536 = vpop.f32.mrb[0].mxu0
  %v537 = vadd.f32 0.0, %v536
  %v538 = vpop.f32.mrb[0].mxu0
  %539 = vmatprep.mubr.bf16.mxu0 0
  %540 = vmatmul.mubr.bf16.gmra.mrb[0].mxu0 %v312
  %v541 = vpop.f32.mrb[0].mxu0
  %v542 = vadd.f32 0.0, %v541
  %v543 = vpop.f32.mrb[0].mxu0
  %v544 = vpop.f32.mrb[0].mxu0
  %v545 = vadd.f32 0.0, %v544
  %v546 = vpop.f32.mrb[0].mxu0
  %547 = vmatprep.mubr.bf16.mxu0 0
  %548 = vmatmul.mubr.bf16.gmra.mrb[0].mxu0 %v315
  %v549 = vpop.f32.mrb[0].mxu0
  %v550 = vadd.f32 0.0, %v549
  %v551 = vpop.f32.mrb[0].mxu0
  %v552 = vpop.f32.mrb[0].mxu0
  %v553 = vadd.f32 0.0, %v552
  %v554 = vpop.f32.mrb[0].mxu0
  %555 = vmatprep.mubr.bf16.mxu0 0
  %556 = vmatmul.mubr.bf16.gmra.mrb[0].mxu0 %v318
  %v557 = vpop.f32.mrb[0].mxu0
  %v558 = vadd.f32 0.0, %v557
  %v559 = vpop.f32.mrb[0].mxu0
  %v560 = vpop.f32.mrb[0].mxu0
  %v561 = vadd.f32 0.0, %v560
  %v562 = vpop.f32.mrb[0].mxu0
  %563 = vmatprep.mubr.bf16.mxu0 0
  %564 = vmatmul.mubr.bf16.gmra.mrb[0].mxu0 %v321
  %v565 = vpop.f32.mrb[0].mxu0
  %v566 = vadd.f32 0.0, %v565
  %v567 = vpop.f32.mrb[0].mxu0
  %v568 = vpop.f32.mrb[0].mxu0
  %v569 = vadd.f32 0.0, %v568
  %v570 = vpop.f32.mrb[0].mxu0
  %571 = vmatprep.mubr.bf16.mxu0 0
  %572 = vmatmul.mubr.bf16.gmra.mrb[0].mxu0 %v324
  %v573 = vpop.f32.mrb[0].mxu0
  %v574 = vadd.f32 0.0, %v573
  %v575 = vpop.f32.mrb[0].mxu0
  %v576 = vpop.f32.mrb[0].mxu0
  %v577 = vadd.f32 0.0, %v576
  %v578 = vpop.f32.mrb[0].mxu0
  %579 = vmatprep.mubr.bf16.mxu0 0
  %580 = vmatmul.mubr.bf16.gmra.mrb[0].mxu0 %v327
  %v581 = vpop.f32.mrb[0].mxu0
  %v582 = vadd.f32 0.0, %v581
  %v583 = vpop.f32.mrb[0].mxu0
  %v584 = vpop.f32.mrb[0].mxu0
  %v585 = vadd.f32 0.0, %v584
  %v586 = vpop.f32.mrb[0].mxu0
  %587 = vmatprep.mubr.bf16.mxu0 0
  %588 = vmatmul.mubr.bf16.gmra.mrb[0].mxu0 %v330
  %v589 = vpop.f32.mrb[0].mxu0
  %v590 = vadd.f32 0.0, %v589
  %v591 = vpop.f32.mrb[0].mxu0
  %v592 = vpop.f32.mrb[0].mxu0
  %v593 = vadd.f32 0.0, %v592
  %v594 = vpop.f32.mrb[0].mxu0
  %595 = vmatprep.mubr.bf16.mxu0 0
  %596 = vmatmul.mubr.bf16.gmra.mrb[0].mxu0 %v333
  %v597 = vpop.f32.mrb[0].mxu0
  %v598 = vadd.f32 0.0, %v597
  %v599 = vpop.f32.mrb[0].mxu0
  %v600 = vpop.f32.mrb[0].mxu0
  %v601 = vadd.f32 0.0, %v600
  %v602 = vpop.f32.mrb[0].mxu0
  %603 = vmatprep.mubr.bf16.mxu0 0
  %604 = vmatmul.mubr.bf16.gmra.mrb[0].mxu0 %v336
  %v605 = vpop.f32.mrb[0].mxu0
  %v606 = vadd.f32 0.0, %v605
  %v607 = vpop.f32.mrb[0].mxu0
  %v608 = vpop.f32.mrb[0].mxu0
  %v609 = vadd.f32 0.0, %v608
  %v610 = vpop.f32.mrb[0].mxu0
  %611 = vmatprep.mubr.bf16.mxu0 0
  %612 = vmatmul.mubr.bf16.gmra.mrb[0].mxu0 %v339
  %v613 = vpop.f32.mrb[0].mxu0
  %v614 = vadd.f32 0.0, %v613
  %v615 = vpop.f32.mrb[0].mxu0
  %v616 = vpop.f32.mrb[0].mxu0
  %v617 = vadd.f32 0.0, %v616
  %v618 = vpop.f32.mrb[0].mxu0
  %619 = vmatprep.mubr.bf16.mxu0 0
  %620 = vmatmul.mubr.bf16.gmra.mrb[0].mxu0 %v342
  %v621 = vpop.f32.mrb[0].mxu0
  %v622 = vadd.f32 0.0, %v621
  %v623 = vpop.f32.mrb[0].mxu0
  %v624 = vpop.f32.mrb[0].mxu0
  %v625 = vadd.f32 0.0, %v624
  %v626 = vpop.f32.mrb[0].mxu0
  %627 = vmatprep.mubr.bf16.mxu0 0
  %628 = vmatmul.mubr.bf16.gmra.mrb[0].mxu0 %v345
  %v629 = vpop.f32.mrb[0].mxu0
  %v630 = vadd.f32 0.0, %v629
  %v631 = vpop.f32.mrb[0].mxu0
  %v632 = vpop.f32.mrb[0].mxu0
  %v633 = vadd.f32 0.0, %v632
  %v634 = vpop.f32.mrb[0].mxu0
  %635 = vdwg.mxu0
  %v636 = vld [vmem:[%s2] sm:$0x1]
  %v638 = vlaneseq
  %v639 = vshrl.u32 %v638, 7
  %v640 = vsub.s32 0, %v639
  %v641 = vrot.slane %v636, %v640
  %v643 = vmul.f32 %v382, %v641
  %v644 = vmul.f32 %v385, %v641
  %v645 = vmul.f32 %v390, %v641
  %v646 = vmul.f32 %v393, %v641
  %v647 = vmul.f32 %v398, %v641
  %v648 = vmul.f32 %v401, %v641
  %v649 = vmul.f32 %v406, %v641
  %v650 = vmul.f32 %v409, %v641
  %v651 = vmul.f32 %v414, %v641
  %v652 = vmul.f32 %v417, %v641
  %v653 = vmul.f32 %v422, %v641
  %v654 = vmul.f32 %v425, %v641
  %v655 = vmul.f32 %v430, %v641
  %v656 = vmul.f32 %v433, %v641
  %v657 = vmul.f32 %v438, %v641
  %v658 = vmul.f32 %v441, %v641
  %v659 = vmul.f32 %v446, %v641
  %v660 = vmul.f32 %v449, %v641
  %v661 = vmul.f32 %v454, %v641
  %v662 = vmul.f32 %v457, %v641
  %v663 = vmul.f32 %v462, %v641
  %v664 = vmul.f32 %v465, %v641
  %v665 = vmul.f32 %v470, %v641
  %v666 = vmul.f32 %v473, %v641
  %v667 = vmul.f32 %v478, %v641
  %v668 = vmul.f32 %v481, %v641
  %v669 = vmul.f32 %v486, %v641
  %v670 = vmul.f32 %v489, %v641
  %v671 = vmul.f32 %v494, %v641
  %v672 = vmul.f32 %v497, %v641
  %v673 = vmul.f32 %v502, %v641
  %v674 = vmul.f32 %v505, %v641
  %v675 = vmul.f32 %v510, %v641
  %v676 = vmul.f32 %v513, %v641
  %v677 = vmul.f32 %v518, %v641
  %v678 = vmul.f32 %v521, %v641
  %v679 = vmul.f32 %v526, %v641
  %v680 = vmul.f32 %v529, %v641
  %v681 = vmul.f32 %v534, %v641
  %v682 = vmul.f32 %v537, %v641
  %v683 = vmul.f32 %v542, %v641
  %v684 = vmul.f32 %v545, %v641
  %v685 = vmul.f32 %v550, %v641
  %v686 = vmul.f32 %v553, %v641
  %v687 = vmul.f32 %v558, %v641
  %v688 = vmul.f32 %v561, %v641
  %v689 = vmul.f32 %v566, %v641
  %v690 = vmul.f32 %v569, %v641
  %v691 = vmul.f32 %v574, %v641
  %v692 = vmul.f32 %v577, %v641
  %v693 = vmul.f32 %v582, %v641
  %v694 = vmul.f32 %v585, %v641
  %v695 = vmul.f32 %v590, %v641
  %v696 = vmul.f32 %v593, %v641
  %v697 = vmul.f32 %v598, %v641
  %v698 = vmul.f32 %v601, %v641
  %v699 = vmul.f32 %v606, %v641
  %v700 = vmul.f32 %v609, %v641
  %v701 = vmul.f32 %v614, %v641
  %v702 = vmul.f32 %v617, %v641
  %v703 = vmul.f32 %v622, %v641
  %v704 = vmul.f32 %v625, %v641
  %v705 = vmul.f32 %v630, %v641
  %v706 = vmul.f32 %v633, %v641
  %v707 = vld [vmem:[%s3] sm:$0x1]
  %v709 = vlaneseq
  %v710 = vshrl.u32 %v709, 7
  %v711 = vsub.s32 0, %v710
  %v712 = vrot.slane %v707, %v711
  %v714 = vadd.f32 %v643, %v712
  %v715 = vadd.f32 %v644, %v712
  %v716 = vadd.f32 %v645, %v712
  %v717 = vadd.f32 %v646, %v712
  %v718 = vadd.f32 %v647, %v712
  %v719 = vadd.f32 %v648, %v712
  %v720 = vadd.f32 %v649, %v712
  %v721 = vadd.f32 %v650, %v712
  %v722 = vadd.f32 %v651, %v712
  %v723 = vadd.f32 %v652, %v712
  %v724 = vadd.f32 %v653, %v712
  %v725 = vadd.f32 %v654, %v712
  %v726 = vadd.f32 %v655, %v712
  %v727 = vadd.f32 %v656, %v712
  %v728 = vadd.f32 %v657, %v712
  %v729 = vadd.f32 %v658, %v712
  %v730 = vadd.f32 %v659, %v712
  %v731 = vadd.f32 %v660, %v712
  %v732 = vadd.f32 %v661, %v712
  %v733 = vadd.f32 %v662, %v712
  %v734 = vadd.f32 %v663, %v712
  %v735 = vadd.f32 %v664, %v712
  %v736 = vadd.f32 %v665, %v712
  %v737 = vadd.f32 %v666, %v712
  %v738 = vadd.f32 %v667, %v712
  %v739 = vadd.f32 %v668, %v712
  %v740 = vadd.f32 %v669, %v712
  %v741 = vadd.f32 %v670, %v712
  %v742 = vadd.f32 %v671, %v712
  %v743 = vadd.f32 %v672, %v712
  %v744 = vadd.f32 %v673, %v712
  %v745 = vadd.f32 %v674, %v712
  %v746 = vadd.f32 %v675, %v712
  %v747 = vadd.f32 %v676, %v712
  %v748 = vadd.f32 %v677, %v712
  %v749 = vadd.f32 %v678, %v712
  %v750 = vadd.f32 %v679, %v712
  %v751 = vadd.f32 %v680, %v712
  %v752 = vadd.f32 %v681, %v712
  %v753 = vadd.f32 %v682, %v712
  %v754 = vadd.f32 %v683, %v712
  %v755 = vadd.f32 %v684, %v712
  %v756 = vadd.f32 %v685, %v712
  %v757 = vadd.f32 %v686, %v712
  %v758 = vadd.f32 %v687, %v712
  %v759 = vadd.f32 %v688, %v712
  %v760 = vadd.f32 %v689, %v712
  %v761 = vadd.f32 %v690, %v712
  %v762 = vadd.f32 %v691, %v712
  %v763 = vadd.f32 %v692, %v712
  %v764 = vadd.f32 %v693, %v712
  %v765 = vadd.f32 %v694, %v712
  %v766 = vadd.f32 %v695, %v712
  %v767 = vadd.f32 %v696, %v712
  %v768 = vadd.f32 %v697, %v712
  %v769 = vadd.f32 %v698, %v712
  %v770 = vadd.f32 %v699, %v712
  %v771 = vadd.f32 %v700, %v712
  %v772 = vadd.f32 %v701, %v712
  %v773 = vadd.f32 %v702, %v712
  %v774 = vadd.f32 %v703, %v712
  %v775 = vadd.f32 %v704, %v712
  %v776 = vadd.f32 %v705, %v712
  %v777 = vadd.f32 %v706, %v712
  %v778 = vmax.f32 %v714, 0.0
  %v779 = vmax.f32 %v715, 0.0
  %v780 = vmax.f32 %v716, 0.0
  %v781 = vmax.f32 %v717, 0.0
  %v782 = vmax.f32 %v718, 0.0
  %v783 = vmax.f32 %v719, 0.0
  %v784 = vmax.f32 %v720, 0.0
  %v785 = vmax.f32 %v721, 0.0
  %v786 = vmax.f32 %v722, 0.0
  %v787 = vmax.f32 %v723, 0.0
  %v788 = vmax.f32 %v724, 0.0
  %v789 = vmax.f32 %v725, 0.0
  %v790 = vmax.f32 %v726, 0.0
  %v791 = vmax.f32 %v727, 0.0
  %v792 = vmax.f32 %v728, 0.0
  %v793 = vmax.f32 %v729, 0.0
  %v794 = vmax.f32 %v730, 0.0
  %v795 = vmax.f32 %v731, 0.0
  %v796 = vmax.f32 %v732, 0.0
  %v797 = vmax.f32 %v733, 0.0
  %v798 = vmax.f32 %v734, 0.0
  %v799 = vmax.f32 %v735, 0.0
  %v800 = vmax.f32 %v736, 0.0
  %v801 = vmax.f32 %v737, 0.0
  %v802 = vmax.f32 %v738, 0.0
  %v803 = vmax.f32 %v739, 0.0
  %v804 = vmax.f32 %v740, 0.0
  %v805 = vmax.f32 %v741, 0.0
  %v806 = vmax.f32 %v742, 0.0
  %v807 = vmax.f32 %v743, 0.0
  %v808 = vmax.f32 %v744, 0.0
  %v809 = vmax.f32 %v745, 0.0
  %v810 = vmax.f32 %v746, 0.0
  %v811 = vmax.f32 %v747, 0.0
  %v812 = vmax.f32 %v748, 0.0
  %v813 = vmax.f32 %v749, 0.0
  %v814 = vmax.f32 %v750, 0.0
  %v815 = vmax.f32 %v751, 0.0
  %v816 = vmax.f32 %v752, 0.0
  %v817 = vmax.f32 %v753, 0.0
  %v818 = vmax.f32 %v754, 0.0
  %v819 = vmax.f32 %v755, 0.0
  %v820 = vmax.f32 %v756, 0.0
  %v821 = vmax.f32 %v757, 0.0
  %v822 = vmax.f32 %v758, 0.0
  %v823 = vmax.f32 %v759, 0.0
  %v824 = vmax.f32 %v760, 0.0
  %v825 = vmax.f32 %v761, 0.0
  %v826 = vmax.f32 %v762, 0.0
  %v827 = vmax.f32 %v763, 0.0
  %v828 = vmax.f32 %v764, 0.0
  %v829 = vmax.f32 %v765, 0.0
  %v830 = vmax.f32 %v766, 0.0
  %v831 = vmax.f32 %v767, 0.0
  %v832 = vmax.f32 %v768, 0.0
  %v833 = vmax.f32 %v769, 0.0
  %v834 = vmax.f32 %v770, 0.0
  %v835 = vmax.f32 %v771, 0.0
  %v836 = vmax.f32 %v772, 0.0
  %v837 = vmax.f32 %v773, 0.0
  %v838 = vmax.f32 %v774, 0.0
  %v839 = vmax.f32 %v775, 0.0
  %v840 = vmax.f32 %v776, 0.0
  %v841 = vmax.f32 %v777, 0.0
  %v842 = vpack.c.bf16 %v779, %v778
  %v843 = vpack.c.bf16 %v781, %v780
  %v844 = vpack.c.bf16 %v783, %v782
  %v845 = vpack.c.bf16 %v785, %v784
  %v846 = vpack.c.bf16 %v787, %v786
  %v847 = vpack.c.bf16 %v789, %v788
  %v848 = vpack.c.bf16 %v791, %v790
  %v849 = vpack.c.bf16 %v793, %v792
  %v850 = vpack.c.bf16 %v795, %v794
  %v851 = vpack.c.bf16 %v797, %v796
  %v852 = vpack.c.bf16 %v799, %v798
  %v853 = vpack.c.bf16 %v801, %v800
  %v854 = vpack.c.bf16 %v803, %v802
  %v855 = vpack.c.bf16 %v805, %v804
  %v856 = vpack.c.bf16 %v807, %v806
  %v857 = vpack.c.bf16 %v809, %v808
  %v858 = vpack.c.bf16 %v811, %v810
  %v859 = vpack.c.bf16 %v813, %v812
  %v860 = vpack.c.bf16 %v815, %v814
  %v861 = vpack.c.bf16 %v817, %v816
  %v862 = vpack.c.bf16 %v819, %v818
  %v863 = vpack.c.bf16 %v821, %v820
  %v864 = vpack.c.bf16 %v823, %v822
  %v865 = vpack.c.bf16 %v825, %v824
  %v866 = vpack.c.bf16 %v827, %v826
  %v867 = vpack.c.bf16 %v829, %v828
  %v868 = vpack.c.bf16 %v831, %v830
  %v869 = vpack.c.bf16 %v833, %v832
  %v870 = vpack.c.bf16 %v835, %v834
  %v871 = vpack.c.bf16 %v837, %v836
  %v872 = vpack.c.bf16 %v839, %v838
  %v873 = vpack.c.bf16 %v841, %v840
  %v906 = vunpack.c.l.b16 %v842
  %v907 = vunpack.c.h.b16 %v842
  %v908 = vunpack.c.l.b16 %v843
  %v909 = vunpack.c.h.b16 %v843
  %v910 = vunpack.c.l.b16 %v844
  %v911 = vunpack.c.h.b16 %v844
  %v912 = vunpack.c.l.b16 %v845
  %v913 = vunpack.c.h.b16 %v845
  %v914 = vunpack.c.l.b16 %v846
  %v915 = vunpack.c.h.b16 %v846
  %v916 = vunpack.c.l.b16 %v847
  %v917 = vunpack.c.h.b16 %v847
  %v918 = vunpack.c.l.b16 %v848
  %v919 = vunpack.c.h.b16 %v848
  %v920 = vunpack.c.l.b16 %v849
  %v921 = vunpack.c.h.b16 %v849
  %v922 = vunpack.c.l.b16 %v850
  %v923 = vunpack.c.h.b16 %v850
  %v924 = vunpack.c.l.b16 %v851
  %v925 = vunpack.c.h.b16 %v851
  %v926 = vunpack.c.l.b16 %v852
  %v927 = vunpack.c.h.b16 %v852
  %v928 = vunpack.c.l.b16 %v853
  %v929 = vunpack.c.h.b16 %v853
  %v930 = vunpack.c.l.b16 %v854
  %v931 = vunpack.c.h.b16 %v854
  %v932 = vunpack.c.l.b16 %v855
  %v933 = vunpack.c.h.b16 %v855
  %v934 = vunpack.c.l.b16 %v856
  %v935 = vunpack.c.h.b16 %v856
  %v936 = vunpack.c.l.b16 %v857
  %v937 = vunpack.c.h.b16 %v857
  %v938 = vunpack.c.l.b16 %v858
  %v939 = vunpack.c.h.b16 %v858
  %v940 = vunpack.c.l.b16 %v859
  %v941 = vunpack.c.h.b16 %v859
  %v942 = vunpack.c.l.b16 %v860
  %v943 = vunpack.c.h.b16 %v860
  %v944 = vunpack.c.l.b16 %v861
  %v945 = vunpack.c.h.b16 %v861
  %v946 = vunpack.c.l.b16 %v862
  %v947 = vunpack.c.h.b16 %v862
  %v948 = vunpack.c.l.b16 %v863
  %v949 = vunpack.c.h.b16 %v863
  %v950 = vunpack.c.l.b16 %v864
  %v951 = vunpack.c.h.b16 %v864
  %v952 = vunpack.c.l.b16 %v865
  %v953 = vunpack.c.h.b16 %v865
  %v954 = vunpack.c.l.b16 %v866
  %v955 = vunpack.c.h.b16 %v866
  %v956 = vunpack.c.l.b16 %v867
  %v957 = vunpack.c.h.b16 %v867
  %v958 = vunpack.c.l.b16 %v868
  %v959 = vunpack.c.h.b16 %v868
  %v960 = vunpack.c.l.b16 %v869
  %v961 = vunpack.c.h.b16 %v869
  %v962 = vunpack.c.l.b16 %v870
  %v963 = vunpack.c.h.b16 %v870
  %v964 = vunpack.c.l.b16 %v871
  %v965 = vunpack.c.h.b16 %v871
  %v966 = vunpack.c.l.b16 %v872
  %v967 = vunpack.c.h.b16 %v872
  %v968 = vunpack.c.l.b16 %v873
  %v969 = vunpack.c.h.b16 %v873
  %v970 = vpack.c.b16 %v906, %v906
  %v971 = vpack.c.b16 %v907, %v907
  %v972 = vpack.c.b16 %v908, %v908
  %v973 = vpack.c.b16 %v909, %v909
  %v974 = vpack.c.b16 %v910, %v910
  %v975 = vpack.c.b16 %v911, %v911
  %v976 = vpack.c.b16 %v912, %v912
  %v977 = vpack.c.b16 %v913, %v913
  %v978 = vpack.c.b16 %v914, %v914
  %v979 = vpack.c.b16 %v915, %v915
  %v980 = vpack.c.b16 %v916, %v916
  %v981 = vpack.c.b16 %v917, %v917
  %v982 = vpack.c.b16 %v918, %v918
  %v983 = vpack.c.b16 %v919, %v919
  %v984 = vpack.c.b16 %v920, %v920
  %v985 = vpack.c.b16 %v921, %v921
  %v986 = vpack.c.b16 %v922, %v922
  %v987 = vpack.c.b16 %v923, %v923
  %v988 = vpack.c.b16 %v924, %v924
  %v989 = vpack.c.b16 %v925, %v925
  %v990 = vpack.c.b16 %v926, %v926
  %v991 = vpack.c.b16 %v927, %v927
  %v992 = vpack.c.b16 %v928, %v928
  %v993 = vpack.c.b16 %v929, %v929
  %v994 = vpack.c.b16 %v930, %v930
  %v995 = vpack.c.b16 %v931, %v931
  %v996 = vpack.c.b16 %v932, %v932
  %v997 = vpack.c.b16 %v933, %v933
  %v998 = vpack.c.b16 %v934, %v934
  %v999 = vpack.c.b16 %v935, %v935
  %v1000 = vpack.c.b16 %v936, %v936
  %v1001 = vpack.c.b16 %v937, %v937
  %v1002 = vpack.c.b16 %v938, %v938
  %v1003 = vpack.c.b16 %v939, %v939
  %v1004 = vpack.c.b16 %v940, %v940
  %v1005 = vpack.c.b16 %v941, %v941
  %v1006 = vpack.c.b16 %v942, %v942
  %v1007 = vpack.c.b16 %v943, %v943
  %v1008 = vpack.c.b16 %v944, %v944
  %v1009 = vpack.c.b16 %v945, %v945
  %v1010 = vpack.c.b16 %v946, %v946
  %v1011 = vpack.c.b16 %v947, %v947
  %v1012 = vpack.c.b16 %v948, %v948
  %v1013 = vpack.c.b16 %v949, %v949
  %v1014 = vpack.c.b16 %v950, %v950
  %v1015 = vpack.c.b16 %v951, %v951
  %v1016 = vpack.c.b16 %v952, %v952
  %v1017 = vpack.c.b16 %v953, %v953
  %v1018 = vpack.c.b16 %v954, %v954
  %v1019 = vpack.c.b16 %v955, %v955
  %v1020 = vpack.c.b16 %v956, %v956
  %v1021 = vpack.c.b16 %v957, %v957
  %v1022 = vpack.c.b16 %v958, %v958
  %v1023 = vpack.c.b16 %v959, %v959
  %v1024 = vpack.c.b16 %v960, %v960
  %v1025 = vpack.c.b16 %v961, %v961
  %v1026 = vpack.c.b16 %v962, %v962
  %v1027 = vpack.c.b16 %v963, %v963
  %v1028 = vpack.c.b16 %v964, %v964
  %v1029 = vpack.c.b16 %v965, %v965
  %v1030 = vpack.c.b16 %v966, %v966
  %v1031 = vpack.c.b16 %v967, %v967
  %v1032 = vpack.c.b16 %v968, %v968
  %v1033 = vpack.c.b16 %v969, %v969
  %vm1098 = vcmask 27648
  %1099 = vst.msk [vmem:[%s4] sm:$0xf] %vm1098, %v970
  %1100 = vst.msk [vmem:[%s4 + $0x4] sm:$0xf] %vm1098, %v971
  %1101 = vst.msk [vmem:[%s4 + $0x8] sm:$0xf] %vm1098, %v972
  %1102 = vst.msk [vmem:[%s4 + $0xc] sm:$0xf] %vm1098, %v973
  %1103 = vst.msk [vmem:[%s4 + $0x10] sm:$0xf] %vm1098, %v974
  %1104 = vst.msk [vmem:[%s4 + $0x14] sm:$0xf] %vm1098, %v975
  %1105 = vst.msk [vmem:[%s4 + $0x18] sm:$0xf] %vm1098, %v976
  %1106 = vst.msk [vmem:[%s4 + $0x1c] sm:$0xf] %vm1098, %v977
  %1107 = vst.msk [vmem:[%s4 + $0x20] sm:$0xf] %vm1098, %v978
  %1108 = vst.msk [vmem:[%s4 + $0x24] sm:$0xf] %vm1098, %v979
  %1109 = vst.msk [vmem:[%s4 + $0x28] sm:$0xf] %vm1098, %v980
  %1110 = vst.msk [vmem:[%s4 + $0x2c] sm:$0xf] %vm1098, %v981
  %1111 = vst.msk [vmem:[%s4 + $0x30] sm:$0xf] %vm1098, %v982
  %1112 = vst.msk [vmem:[%s4 + $0x34] sm:$0xf] %vm1098, %v983
  %1113 = vst.msk [vmem:[%s4 + $0x38] sm:$0xf] %vm1098, %v984
  %1114 = vst.msk [vmem:[%s4 + $0x3c] sm:$0xf] %vm1098, %v985
  %1115 = vst.msk [vmem:[%s4 + $0x40] sm:$0xf] %vm1098, %v986
  %1116 = vst.msk [vmem:[%s4 + $0x44] sm:$0xf] %vm1098, %v987
  %1117 = vst.msk [vmem:[%s4 + $0x48] sm:$0xf] %vm1098, %v988
  %1118 = vst.msk [vmem:[%s4 + $0x4c] sm:$0xf] %vm1098, %v989
  %1119 = vst.msk [vmem:[%s4 + $0x50] sm:$0xf] %vm1098, %v990
  %1120 = vst.msk [vmem:[%s4 + $0x54] sm:$0xf] %vm1098, %v991
  %1121 = vst.msk [vmem:[%s4 + $0x58] sm:$0xf] %vm1098, %v992
  %1122 = vst.msk [vmem:[%s4 + $0x5c] sm:$0xf] %vm1098, %v993
  %1123 = vst.msk [vmem:[%s4 + $0x60] sm:$0xf] %vm1098, %v994
  %1124 = vst.msk [vmem:[%s4 + $0x64] sm:$0xf] %vm1098, %v995
  %1125 = vst.msk [vmem:[%s4 + $0x68] sm:$0xf] %vm1098, %v996
  %1126 = vst.msk [vmem:[%s4 + $0x6c] sm:$0xf] %vm1098, %v997
  %1127 = vst.msk [vmem:[%s4 + $0x70] sm:$0xf] %vm1098, %v998
  %1128 = vst.msk [vmem:[%s4 + $0x74] sm:$0xf] %vm1098, %v999
  %1129 = vst.msk [vmem:[%s4 + $0x78] sm:$0xf] %vm1098, %v1000
  %1130 = vst.msk [vmem:[%s4 + $0x7c] sm:$0xf] %vm1098, %v1001
  %1131 = vst.msk [vmem:[%s4 + $0x80] sm:$0xf] %vm1098, %v1002
  %1132 = vst.msk [vmem:[%s4 + $0x84] sm:$0xf] %vm1098, %v1003
  %1133 = vst.msk [vmem:[%s4 + $0x88] sm:$0xf] %vm1098, %v1004
  %1134 = vst.msk [vmem:[%s4 + $0x8c] sm:$0xf] %vm1098, %v1005
  %1135 = vst.msk [vmem:[%s4 + $0x90] sm:$0xf] %vm1098, %v1006
  %1136 = vst.msk [vmem:[%s4 + $0x94] sm:$0xf] %vm1098, %v1007
  %1137 = vst.msk [vmem:[%s4 + $0x98] sm:$0xf] %vm1098, %v1008
  %1138 = vst.msk [vmem:[%s4 + $0x9c] sm:$0xf] %vm1098, %v1009
  %1139 = vst.msk [vmem:[%s4 + $0xa0] sm:$0xf] %vm1098, %v1010
  %1140 = vst.msk [vmem:[%s4 + $0xa4] sm:$0xf] %vm1098, %v1011
  %1141 = vst.msk [vmem:[%s4 + $0xa8] sm:$0xf] %vm1098, %v1012
  %1142 = vst.msk [vmem:[%s4 + $0xac] sm:$0xf] %vm1098, %v1013
  %1143 = vst.msk [vmem:[%s4 + $0xb0] sm:$0xf] %vm1098, %v1014
  %1144 = vst.msk [vmem:[%s4 + $0xb4] sm:$0xf] %vm1098, %v1015
  %1145 = vst.msk [vmem:[%s4 + $0xb8] sm:$0xf] %vm1098, %v1016
  %1146 = vst.msk [vmem:[%s4 + $0xbc] sm:$0xf] %vm1098, %v1017
  %1147 = vst.msk [vmem:[%s4 + $0xc0] sm:$0xf] %vm1098, %v1018
  %1148 = vst.msk [vmem:[%s4 + $0xc4] sm:$0xf] %vm1098, %v1019
  %1149 = vst.msk [vmem:[%s4 + $0xc8] sm:$0xf] %vm1098, %v1020
  %1150 = vst.msk [vmem:[%s4 + $0xcc] sm:$0xf] %vm1098, %v1021
  %1151 = vst.msk [vmem:[%s4 + $0xd0] sm:$0xf] %vm1098, %v1022
  %1152 = vst.msk [vmem:[%s4 + $0xd4] sm:$0xf] %vm1098, %v1023
  %1153 = vst.msk [vmem:[%s4 + $0xd8] sm:$0xf] %vm1098, %v1024
  %1154 = vst.msk [vmem:[%s4 + $0xdc] sm:$0xf] %vm1098, %v1025
  %1155 = vst.msk [vmem:[%s4 + $0xe0] sm:$0xf] %vm1098, %v1026
  %1156 = vst.msk [vmem:[%s4 + $0xe4] sm:$0xf] %vm1098, %v1027
  %1157 = vst.msk [vmem:[%s4 + $0xe8] sm:$0xf] %vm1098, %v1028
  %1158 = vst.msk [vmem:[%s4 + $0xec] sm:$0xf] %vm1098, %v1029
  %1159 = vst.msk [vmem:[%s4 + $0xf0] sm:$0xf] %vm1098, %v1030
  %1160 = vst.msk [vmem:[%s4 + $0xf4] sm:$0xf] %vm1098, %v1031
  %1161 = vst.msk [vmem:[%s4 + $0xf8] sm:$0xf] %vm1098, %v1032
  %1162 = vst.msk [vmem:[%s4 + $0xfc] sm:$0xf] %vm1098, %v1033
  // Predicated region
  $region18: #{tpu_custom_call.1} parent=0 // pred_check
    _
  $region19: #{tpu_custom_call.1} parent=0 // pred_check_branch
    %1164 = sbr.rel (0) target = $region21
  $region20: #{tpu_custom_call.1} parent=0 // pred_region
    _
  $region21: #{tpu_custom_call.1} parent=0 // pred_fallthru
    _
  // Predicated region
  $region22: #{tpu_custom_call.1} parent=0 // pred_check
    _
  $region23: #{tpu_custom_call.1} parent=0 // pred_check_branch
    %1166 = sbr.rel (0) target = $region25
  $region24: #{tpu_custom_call.1} parent=0 // pred_region
    _
  $region25: #{tpu_custom_call.1} parent=0 // pred_fallthru
    _

</llo_original>
